<compile_context>
chip_gen: v5e
topology: v5e:2x2
jax: 0.10.0
libtpu: 0.0.40
codegen_flags: <defaults>
</compile_context>

<pallas_src>
import jax
import jax.numpy as jnp
from jax.experimental import pallas as pl
from jax.experimental.pallas import tpu as pltpu


def _make_embed_delta_kernel(token_block: int):
    TB = token_block

    def kernel(tok_ref, sd_ref,            # SMEM scalar-prefetch (T_pad,) int32
               mask_ref,                   # (TB, 2) int32: [:,0]=apply-delta, [:,1]=keep-row
               base_hbm, delta_hbm,        # raw HBM refs (memory_space=ANY)
               out_ref,                    # (TB, D) output block
               base_buf, delta_buf, sem):  # VMEM scratch + 2 shared DMA semaphores
        b = pl.program_id(0)
        off = b * TB

        # Issue all 2*TB row-gather DMAs (one shared semaphore per table)
        # before waiting on any of them.  All SMEM reads precede the first wait.
        @pl.loop(0, TB)
        def _start(i):
            t = tok_ref[off + i]            # clamped token id within this partition
            d = sd_ref[off + i]             # clamped delta slot (>= 0)
            pltpu.make_async_copy(base_hbm.at[t], base_buf.at[i], sem.at[0]).start()
            pltpu.make_async_copy(delta_hbm.at[d, t], delta_buf.at[i], sem.at[1]).start()

        # Drain: one wait per issued copy.  Only the destination size and the
        # semaphore matter for a wait, so a fixed src index is fine.
        @pl.loop(0, TB)
        def _wait(i):
            pltpu.make_async_copy(base_hbm.at[0], base_buf.at[i], sem.at[0]).wait()
            pltpu.make_async_copy(delta_hbm.at[0, 0], delta_buf.at[i], sem.at[1]).wait()

        base = base_buf[...]                # (TB, D), weight dtype
        delta = delta_buf[...]              # (TB, D), always real data (never stale VMEM)
        m = mask_ref[...]                   # (TB, 2) int32
        use = m[:, 0:1] > 0                 # apply delta for this token
        keep = m[:, 1:2] > 0                # token belongs to this vocab partition
        out = base + jnp.where(use, delta, jnp.zeros_like(delta))
        out = jnp.where(keep, out, jnp.zeros_like(out))
        out_ref[...] = out.astype(out_ref.dtype)

    return kernel


def _pick_token_block(T, D, itemsize, token_block):
    """Dtype-sublane-aligned, VMEM-budgeted token block; keeps >= 2 blocks when possible."""
    mult = max(8, 32 // itemsize)           # packed sublane tile: f32->8, bf16->16, int8->32
    if token_block is not None:
        return max(mult, (int(token_block) // mult) * mult)
    tb = 256                                # target (review: 128-256)
    # VMEM budget: base_buf + delta_buf + double-buffered out ~= 4*TB*D*itemsize <= 24 MiB.
    budget = 24 * 1024 * 1024
    max_tb = max(mult, (budget // (4 * D * itemsize)) // mult * mult)
    tb = min(tb, int(max_tb))
    # Keep at least 2 grid blocks for small T so both v7x TensorCores get work.
    half = (T + 1) // 2
    half_aligned = ((half + mult - 1) // mult) * mult
    return int(min(tb, max(mult, half_aligned)))


def vocab_parallel_embedding_with_delta(x, base_weight, delta_weights, indices,
                                        vocab_start_index=0, vocab_end_index=None,
                                        tp_size=1, token_block=None):
    """JAX wrapper reproducing VocabParallelEmbeddingWithDelta.forward."""
    orig_shape = x.shape
    x = x.reshape(-1).astype(jnp.int32)
    T = int(x.shape[0])
    V_part, D = base_weight.shape
    out_dtype = base_weight.dtype
    itemsize = jnp.dtype(out_dtype).itemsize
    if vocab_end_index is None:
        vocab_end_index = vocab_start_index + V_part

    if T == 0:                              # empty token batch guard
        return jnp.zeros(orig_shape + (D,), dtype=out_dtype)

    if delta_weights.shape[0] == 0:         # no delta slots allocated -> act as zeros
        delta_weights = jnp.zeros((1, V_part, D), dtype=out_dtype)

    if tp_size > 1:
        input_mask = (x < vocab_start_index) | (x >= vocab_end_index)
        masked_input = jnp.where(input_mask, 0, x - vocab_start_index)
    else:
        input_mask = jnp.zeros_like(x, dtype=bool)
        masked_input = x

    # Mirror indices_len semantics defensively: tokens past len(indices) get no delta.
    indices = jnp.asarray(indices).reshape(-1).astype(jnp.int32)
    if indices.shape[0] < T:
        indices = jnp.pad(indices, (0, T - indices.shape[0]), constant_values=-1)
    indices = indices[:T]

    TB = _pick_token_block(T, D, itemsize, token_block)
    n_blocks = pl.cdiv(T, TB)
    T_pad = n_blocks * TB
    pad = T_pad - T

    tok = jnp.pad(masked_input, (0, pad))                        # padded rows gather row 0
    didx = jnp.pad(indices, (0, pad), constant_values=-1)        # padded rows: no delta
    keep = jnp.pad((~input_mask).astype(jnp.int32), (0, pad))    # padded rows zeroed (sliced off)
    sd = jnp.maximum(didx, 0).astype(jnp.int32)                  # clamped delta slot (masked anyway)
    use = (didx >= 0).astype(jnp.int32)
    mask2 = jnp.stack([use, keep], axis=1)                       # fused (T_pad, 2) mask input

    grid_spec = pltpu.PrefetchScalarGridSpec(
        num_scalar_prefetch=2,                                   # tok, sd -> SMEM
        grid=(n_blocks,),
        in_specs=[
            pl.BlockSpec((TB, 2), lambda b, tok, sd: (b, 0)),    # fused use/keep mask
            pl.BlockSpec(memory_space=pl.ANY),                   # base_weight   (HBM)
            pl.BlockSpec(memory_space=pl.ANY),                   # delta_weights (HBM)
        ],
        out_specs=pl.BlockSpec((TB, D), lambda b, tok, sd: (b, 0)),
        scratch_shapes=[
            pltpu.VMEM((TB, D), out_dtype),                      # gathered base rows
            pltpu.VMEM((TB, D), out_dtype),                      # gathered delta rows
            pltpu.SemaphoreType.DMA((2,)),                       # shared sems: [base, delta]
        ],
    )

    out = pl.pallas_call(
        _make_embed_delta_kernel(TB),
        out_shape=jax.ShapeDtypeStruct((T_pad, D), out_dtype),
        grid_spec=grid_spec,
        compiler_params=pltpu.CompilerParams(
            dimension_semantics=("parallel",),                   # token blocks are independent
            vmem_limit_bytes=32 * 1024 * 1024),                  # raise v5e's 16 MiB default
    )(tok, sd, mask2, base_weight, delta_weights)

    if pad:
        out = out[:T]
    # TODO(synk): tensor_model_parallel_all_reduce is identity for tp_size == 1;
    # under real TP this would be a jax.lax.psum over the tensor-parallel mesh axis.
    return out.reshape(orig_shape + (D,))


def _reference(x, base_weight, delta_weights, indices,
               vocab_start_index=0, vocab_end_index=None, tp_size=1):
    """Pure-JAX reference of the module forward."""
    V_part, D = base_weight.shape
    if vocab_end_index is None:
        vocab_end_index = vocab_start_index + V_part
    if tp_size > 1:
        mask = (x < vocab_start_index) | (x >= vocab_end_index)
        mi = jnp.where(mask, 0, x - vocab_start_index)
    else:
        mask = jnp.zeros_like(x, dtype=bool)
        mi = x
    safe = jnp.maximum(indices, 0)
    zero = jnp.zeros((), dtype=base_weight.dtype)
    ref = base_weight[mi] + jnp.where((indices >= 0)[:, None],
                                      delta_weights[safe, mi], zero)
    return jnp.where(mask[:, None], zero, ref)


if __name__ == "__main__":
    key = jax.random.PRNGKey(0)
    k_w, k_d, k_x, k_i, k_w2, k_d2, k_x2, k_i2 = jax.random.split(key, 8)

    # --- Test 1: tp_size == 1, float32 tables, ragged token count ---
    T, V, D, MAX_DELTAS = 13, 64, 128, 2
    base_weight = jax.random.normal(k_w, (V, D), dtype=jnp.float32)
    delta_weights = jax.random.normal(k_d, (MAX_DELTAS, V, D), dtype=jnp.float32) * 0.1
    x = jax.random.randint(k_x, (T,), 0, V, dtype=jnp.int32)
    indices = jax.random.randint(k_i, (T,), -1, MAX_DELTAS, dtype=jnp.int32)

    out = vocab_parallel_embedding_with_delta(
        x, base_weight, delta_weights, indices,
        vocab_start_index=0, vocab_end_index=V, tp_size=1)
    out = jax.block_until_ready(out)
    ref = _reference(x, base_weight, delta_weights, indices, 0, V, 1)
    assert out.shape == (T, D) and out.dtype == jnp.float32
    assert jnp.allclose(out, ref, atol=1e-5, rtol=1e-5), "mismatch vs reference (test 1)"

    # --- Test 2: tp_size == 2 partition masking, bfloat16 tables (TB aligned to 16) ---
    T2, V_GLOBAL, V_PART, D2, MAX_D2 = 37, 96, 32, 256, 3
    VS, VE = 32, 64                                  # this rank owns vocab rows [32, 64)
    bw2 = (jax.random.normal(k_w2, (V_PART, D2), dtype=jnp.float32)).astype(jnp.bfloat16)
    dw2 = (jax.random.normal(k_d2, (MAX_D2, V_PART, D2), dtype=jnp.float32) * 0.1
           ).astype(jnp.bfloat16)
    x2 = jax.random.randint(k_x2, (T2,), 0, V_GLOBAL, dtype=jnp.int32)
    idx2 = jax.random.randint(k_i2, (T2,), -1, MAX_D2, dtype=jnp.int32)

    out2 = vocab_parallel_embedding_with_delta(
        x2, bw2, dw2, idx2, vocab_start_index=VS, vocab_end_index=VE, tp_size=2)
    out2 = jax.block_until_ready(out2)
    ref2 = _reference(x2, bw2, dw2, idx2, VS, VE, 2)
    assert out2.shape == (T2, D2) and out2.dtype == jnp.bfloat16
    assert jnp.allclose(out2.astype(jnp.float32), ref2.astype(jnp.float32),
                        atol=1e-2, rtol=1e-2), "mismatch vs reference (test 2)"

    print("KERNEL_OK")
</pallas_src>

<mosaic_0001>
module attributes {stable_mosaic.version = 11 : i64} {
  func.func @kernel(%arg0: i32, %arg1: memref<16xi32, #tpu.memory_space<smem>>, %arg2: memref<16xi32, #tpu.memory_space<smem>>, %arg3: memref<8x2xi32, #tpu.memory_space<vmem>>, %arg4: memref<64x128xf32, #tpu.memory_space<any>>, %arg5: memref<2x64x128xf32, #tpu.memory_space<any>>, %arg6: memref<8x128xf32, #tpu.memory_space<vmem>>, %arg7: memref<8x128xf32, #tpu.memory_space<vmem>>, %arg8: memref<8x128xf32, #tpu.memory_space<vmem>>, %arg9: memref<2x!tpu.dma_semaphore, #tpu.memory_space<semaphore_mem>>) attributes {dimension_semantics = [#tpu.dimension_semantics<parallel>], iteration_bounds = array<i64: 2>, scalar_prefetch = 2 : i64, scratch_operands = 3 : i64, tpu.core_type = #tpu.core_type<tc>, window_params = [{transform_indices = @transform_0, window_bounds = array<i64: 8, 2>}, {}, {}, {transform_indices = @transform_3, window_bounds = array<i64: 8, 128>}]} {
    %c8_i32 = arith.constant 8 : i32
    %0 = arith.muli %arg0, %c8_i32 : i32
    %c0_i32 = arith.constant 0 : i32
    %c8_i32_0 = arith.constant 8 : i32
    %1 = arith.addi %c0_i32, %c8_i32_0 : i32
    %c1_i32 = arith.constant 1 : i32
    scf.for %arg10 = %c0_i32 to %1 step %c1_i32  : i32 {
      %c1_i32_16 = arith.constant 1 : i32
      %22 = arith.muli %arg10, %c1_i32_16 : i32
      %c0_i32_17 = arith.constant 0 : i32
      %23 = arith.addi %c0_i32_17, %22 : i32
      %24 = arith.addi %0, %23 : i32
      %25 = arith.index_cast %24 : i32 to index
      %26 = memref.load %arg1[%25] : memref<16xi32, #tpu.memory_space<smem>>
      %27 = arith.addi %0, %23 : i32
      %28 = arith.index_cast %27 : i32 to index
      %29 = memref.load %arg2[%28] : memref<16xi32, #tpu.memory_space<smem>>
      %c0_i32_18 = arith.constant 0 : i32
      %c0_i32_19 = arith.constant 0 : i32
      %30 = tpu.memref_slice %arg4[%26, %c0_i32_19] : memref<64x128xf32, #tpu.memory_space<any>> -> memref<1x128xf32, #tpu.memory_space<any>>
      %31 = tpu.memref_squeeze %30 : memref<1x128xf32, #tpu.memory_space<any>> -> memref<128xf32, #tpu.memory_space<any>>
      %c0_i32_20 = arith.constant 0 : i32
      %32 = tpu.memref_slice %arg7[%23, %c0_i32_20] : memref<8x128xf32, #tpu.memory_space<vmem>> -> memref<1x128xf32, #tpu.memory_space<vmem>>
      %33 = tpu.memref_squeeze %32 : memref<1x128xf32, #tpu.memory_space<vmem>> -> memref<128xf32, #tpu.memory_space<vmem>>
      %34 = tpu.memref_slice %arg9[%c0_i32_18] : memref<2x!tpu.dma_semaphore, #tpu.memory_space<semaphore_mem>> -> memref<1x!tpu.dma_semaphore, #tpu.memory_space<semaphore_mem>>
      %35 = tpu.memref_squeeze %34 : memref<1x!tpu.dma_semaphore, #tpu.memory_space<semaphore_mem>> -> memref<!tpu.dma_semaphore, #tpu.memory_space<semaphore_mem>>
      tpu.enqueue_dma source(%31 : memref<128xf32, #tpu.memory_space<any>>) target(%33 : memref<128xf32, #tpu.memory_space<vmem>>) target_semaphore(%35 : memref<!tpu.dma_semaphore, #tpu.memory_space<semaphore_mem>>)
      %c1_i32_21 = arith.constant 1 : i32
      %c0_i32_22 = arith.constant 0 : i32
      %36 = tpu.memref_slice %arg5[%29, %26, %c0_i32_22] : memref<2x64x128xf32, #tpu.memory_space<any>> -> memref<1x1x128xf32, #tpu.memory_space<any>>
      %37 = tpu.memref_squeeze %36 : memref<1x1x128xf32, #tpu.memory_space<any>> -> memref<128xf32, #tpu.memory_space<any>>
      %c0_i32_23 = arith.constant 0 : i32
      %38 = tpu.memref_slice %arg8[%23, %c0_i32_23] : memref<8x128xf32, #tpu.memory_space<vmem>> -> memref<1x128xf32, #tpu.memory_space<vmem>>
      %39 = tpu.memref_squeeze %38 : memref<1x128xf32, #tpu.memory_space<vmem>> -> memref<128xf32, #tpu.memory_space<vmem>>
      %40 = tpu.memref_slice %arg9[%c1_i32_21] : memref<2x!tpu.dma_semaphore, #tpu.memory_space<semaphore_mem>> -> memref<1x!tpu.dma_semaphore, #tpu.memory_space<semaphore_mem>>
      %41 = tpu.memref_squeeze %40 : memref<1x!tpu.dma_semaphore, #tpu.memory_space<semaphore_mem>> -> memref<!tpu.dma_semaphore, #tpu.memory_space<semaphore_mem>>
      tpu.enqueue_dma source(%37 : memref<128xf32, #tpu.memory_space<any>>) target(%39 : memref<128xf32, #tpu.memory_space<vmem>>) target_semaphore(%41 : memref<!tpu.dma_semaphore, #tpu.memory_space<semaphore_mem>>)
    }
    %c8_i32_1 = arith.constant 8 : i32
    %c0_i32_2 = arith.constant 0 : i32
    %c8_i32_3 = arith.constant 8 : i32
    %2 = arith.addi %c0_i32_2, %c8_i32_3 : i32
    %c1_i32_4 = arith.constant 1 : i32
    scf.for %arg10 = %c0_i32_2 to %2 step %c1_i32_4  : i32 {
      %c1_i32_16 = arith.constant 1 : i32
      %22 = arith.muli %arg10, %c1_i32_16 : i32
      %c0_i32_17 = arith.constant 0 : i32
      %23 = arith.addi %c0_i32_17, %22 : i32
      %c0_i32_18 = arith.constant 0 : i32
      %c0_i32_19 = arith.constant 0 : i32
      %c0_i32_20 = arith.constant 0 : i32
      %24 = tpu.memref_slice %arg4[%c0_i32_18, %c0_i32_20] : memref<64x128xf32, #tpu.memory_space<any>> -> memref<1x128xf32, #tpu.memory_space<any>>
      %25 = tpu.memref_squeeze %24 : memref<1x128xf32, #tpu.memory_space<any>> -> memref<128xf32, #tpu.memory_space<any>>
      %c0_i32_21 = arith.constant 0 : i32
      %26 = tpu.memref_slice %arg7[%23, %c0_i32_21] : memref<8x128xf32, #tpu.memory_space<vmem>> -> memref<1x128xf32, #tpu.memory_space<vmem>>
      %27 = tpu.memref_squeeze %26 : memref<1x128xf32, #tpu.memory_space<vmem>> -> memref<128xf32, #tpu.memory_space<vmem>>
      %28 = tpu.memref_slice %arg9[%c0_i32_19] : memref<2x!tpu.dma_semaphore, #tpu.memory_space<semaphore_mem>> -> memref<1x!tpu.dma_semaphore, #tpu.memory_space<semaphore_mem>>
      %29 = tpu.memref_squeeze %28 : memref<1x!tpu.dma_semaphore, #tpu.memory_space<semaphore_mem>> -> memref<!tpu.dma_semaphore, #tpu.memory_space<semaphore_mem>>
      tpu.wait_dma2 semaphore(%29 : memref<!tpu.dma_semaphore, #tpu.memory_space<semaphore_mem>>) src(%25 : memref<128xf32, #tpu.memory_space<any>>) dst(%27 : memref<128xf32, #tpu.memory_space<vmem>>)
      %c0_i32_22 = arith.constant 0 : i32
      %c0_i32_23 = arith.constant 0 : i32
      %c1_i32_24 = arith.constant 1 : i32
      %c0_i32_25 = arith.constant 0 : i32
      %30 = tpu.memref_slice %arg5[%c0_i32_22, %c0_i32_23, %c0_i32_25] : memref<2x64x128xf32, #tpu.memory_space<any>> -> memref<1x1x128xf32, #tpu.memory_space<any>>
      %31 = tpu.memref_squeeze %30 : memref<1x1x128xf32, #tpu.memory_space<any>> -> memref<128xf32, #tpu.memory_space<any>>
      %c0_i32_26 = arith.constant 0 : i32
      %32 = tpu.memref_slice %arg8[%23, %c0_i32_26] : memref<8x128xf32, #tpu.memory_space<vmem>> -> memref<1x128xf32, #tpu.memory_space<vmem>>
      %33 = tpu.memref_squeeze %32 : memref<1x128xf32, #tpu.memory_space<vmem>> -> memref<128xf32, #tpu.memory_space<vmem>>
      %34 = tpu.memref_slice %arg9[%c1_i32_24] : memref<2x!tpu.dma_semaphore, #tpu.memory_space<semaphore_mem>> -> memref<1x!tpu.dma_semaphore, #tpu.memory_space<semaphore_mem>>
      %35 = tpu.memref_squeeze %34 : memref<1x!tpu.dma_semaphore, #tpu.memory_space<semaphore_mem>> -> memref<!tpu.dma_semaphore, #tpu.memory_space<semaphore_mem>>
      tpu.wait_dma2 semaphore(%35 : memref<!tpu.dma_semaphore, #tpu.memory_space<semaphore_mem>>) src(%31 : memref<128xf32, #tpu.memory_space<any>>) dst(%33 : memref<128xf32, #tpu.memory_space<vmem>>)
    }
    %c8_i32_5 = arith.constant 8 : i32
    %c0 = arith.constant 0 : index
    %c0_6 = arith.constant 0 : index
    %3 = vector.load %arg7[%c0, %c0_6] : memref<8x128xf32, #tpu.memory_space<vmem>>, vector<8x128xf32>
    %c0_7 = arith.constant 0 : index
    %c0_8 = arith.constant 0 : index
    %4 = vector.load %arg8[%c0_7, %c0_8] : memref<8x128xf32, #tpu.memory_space<vmem>>, vector<8x128xf32>
    %c0_9 = arith.constant 0 : index
    %c0_10 = arith.constant 0 : index
    %5 = vector.load %arg3[%c0_9, %c0_10] : memref<8x2xi32, #tpu.memory_space<vmem>>, vector<8x2xi32>
    %6 = vector.extract_strided_slice %5 {offsets = [0, 0], sizes = [8, 1], strides = [1, 1]} : vector<8x2xi32> to vector<8x1xi32>
    %c0_i32_11 = arith.constant 0 : i32
    %7 = vector.broadcast %c0_i32_11 : i32 to vector<8x1xi32>
    %8 = arith.cmpi sgt, %6, %7 : vector<8x1xi32>
    %9 = vector.extract_strided_slice %5 {offsets = [0, 1], sizes = [8, 1], strides = [1, 1]} : vector<8x2xi32> to vector<8x1xi32>
    %c0_i32_12 = arith.constant 0 : i32
    %10 = vector.broadcast %c0_i32_12 : i32 to vector<8x1xi32>
    %11 = arith.cmpi sgt, %9, %10 : vector<8x1xi32>
    %cst = arith.constant 0.000000e+00 : f32
    %12 = vector.broadcast %cst : f32 to vector<8x128xf32>
    %13 = vector.shape_cast %8 : vector<8x1xi1> to vector<8x1xi1>
    %14 = vector.broadcast %13 : vector<8x1xi1> to vector<8x128xi1>
    %15 = arith.select %14, %4, %12 : vector<8x128xi1>, vector<8x128xf32>
    %16 = arith.addf %3, %15 : vector<8x128xf32>
    %cst_13 = arith.constant 0.000000e+00 : f32
    %17 = vector.broadcast %cst_13 : f32 to vector<8x128xf32>
    %18 = vector.shape_cast %11 : vector<8x1xi1> to vector<8x1xi1>
    %19 = vector.broadcast %18 : vector<8x1xi1> to vector<8x128xi1>
    %20 = arith.select %19, %16, %17 : vector<8x128xi1>, vector<8x128xf32>
    %c0_14 = arith.constant 0 : index
    %c0_15 = arith.constant 0 : index
    %21 = vector.load %arg6[%c0_14, %c0_15] : memref<8x128xf32, #tpu.memory_space<vmem>>, vector<8x128xf32>
    tpu.vector_store %arg6[%c0_14, %c0_15], %20 {strides = array<i32>} : memref<8x128xf32, #tpu.memory_space<vmem>>, vector<8x128xf32>,
    return
  }
  func.func @transform_0(%arg0: i32, %arg1: memref<16xi32, #tpu.memory_space<smem>>, %arg2: memref<16xi32, #tpu.memory_space<smem>>) -> (i32, i32) {
    %c0_i32 = arith.constant 0 : i32
    %c0_i32_0 = arith.constant 0 : i32
    return %arg0, %c0_i32 : i32, i32
  }
  func.func @transform_3(%arg0: i32, %arg1: memref<16xi32, #tpu.memory_space<smem>>, %arg2: memref<16xi32, #tpu.memory_space<smem>>) -> (i32, i32) {
    %c0_i32 = arith.constant 0 : i32
    %c0_i32_0 = arith.constant 0 : i32
    return %arg0, %c0_i32 : i32, i32
  }
}

</mosaic_0001>

<llo_original>
// kernel: tpu_custom_call.1
$region0: #{tpu_custom_call.1}
  #allocation0 [shape = 'u32[]', space=smem, size = 0x4, offset = 0x4, fixed_abs, tag = 'smem constant byte address 0x4 - core index']
  #allocation1 [shape = 'u32[72,128]{1,0:T(1,128)}', space=vmem, size = 0x9000, scoped, tag = 'internal scratch']
  #allocation2 [shape = 'f32[8,128]{1,0:T(8,128)}', space=vmem, size = 0x1000, scoped, tag = 'scratch operand']
  #allocation3 [shape = 'f32[8,128]{1,0:T(8,128)}', space=vmem, size = 0x1000, scoped, tag = 'scratch operand']
  #allocation4 [shape = 's32[2]{0}', space=sflag, size = 0x8, scoped, tag = 'scratch operand']
  #allocation5 [shape = 's32[1]{0}', space=sflag, size = 0x4, scoped, tag = 'scoped memory for tpu_custom_call.1']
  #allocation6 [shape = 'u8[512]{0}', space=smem, size = 0x200, scoped, tag = 'prefetched SMEM operand 0']
  #allocation7 [shape = 'u8[512]{0}', space=smem, size = 0x200, scoped, tag = 'prefetched SMEM operand 1']
  #allocation10 [shape = 's32[]', space=sflag, size = 0x4, offset = 0, fixed_abs, tag = 'sflag constant byte address 0x0 - dummy sync flag']
  #allocation11 [shape = 's32[]', space=sflag, size = 0x4, offset = 0, fixed_abs, tag = 'sflag constant byte address 0x0 - dummy sync flag']
  #allocation12 [shape = 'u32[]', space=smem, size = 0x4, offset = 0x44, fixed_abs, tag = 'smem constant byte address 0x44 - assertion arg 0']
  #allocation13 [shape = 'u32[]', space=smem, size = 0x4, offset = 0x48, fixed_abs, tag = 'smem constant byte address 0x48 - assertion arg 1']
  #allocation14 [shape = 's32[]', space=sflag, size = 0x4, offset = 0, fixed_abs, tag = 'sflag constant byte address 0x0 - dummy sync flag']
  #allocation15 [shape = 's32[]', space=sflag, size = 0x4, offset = 0, fixed_abs, tag = 'sflag constant byte address 0x0 - dummy sync flag']
  %s0 = inlined_call_operand.vmem [shape: s32[16], index: 0, kind: input, shape index: {}]
  %s1 = inlined_call_operand.vmem [shape: s32[16], index: 1, kind: input, shape index: {}]
  %s2 = inlined_call_operand.vmem [shape: s32[16,2], index: 2, kind: input, shape index: {}]
  %s3 = inlined_call_operand.hbm [shape: f32[64,128], index: 3, kind: input, shape index: {}]
  %s4 = inlined_call_operand.hbm [shape: f32[2,64,128], index: 4, kind: input, shape index: {}]
  %s5 = inlined_call_operand.hbm [shape: f32[16,128], index: 5, kind: output, shape index: {}]
  %s6 = sld [smem:[#allocation0]]
  $region59: #{tpu_custom_call.1} parent=0
    _
  %s8 = ssub.s32 1, %s6
  %s9 = scalar_select 0, %s8, %s6
  %s11 = sshll.u32 %s0, 4
  %s12 = int_to_ptr.vmem [resolvable:$true] %s11
  %14 = dma.vmem_to_smem %s12, 16, [#allocation6], [#allocation5]
  %s16 = sshll.u32 %s1, 4
  %s17 = int_to_ptr.vmem [resolvable:$true] %s16
  %19 = dma.vmem_to_smem %s17, 16, [#allocation7], [#allocation5]
  %21 = dma.done [#allocation5], 32
  %22 = sfence
  $region1: #{tpu_custom_call.1} parent=0
    #allocation8 [shape = 'u8[8192]{0}', space=vmem, size = 0x2000, scoped, tag = 'output window, operand 0']
    #allocation9 [shape = 's32[2]{0}', space=sflag, size = 0x8, scoped, tag = 'scoped memory for tpu_custom_call.1']
    %23 = vsyncpa [#allocation9], 0
    %s24 = scalar_lea.sflag [#allocation9], 1
    %25 = vsyncpa %s24, 0
    loop: start=0, step=1, limit=4
    $region2: #{tpu_custom_call.1} parent=1 // loop_pre_header
      _
    $region3: #{tpu_custom_call.1} parent=1 // loop_header
      %s27 = sphi 0, %s31
      %p28 = scmp.ge.s32.totalorder %s27, 4
      %s37 = sphi 0, %s39
      %s40 = sphi 0, %s37
      %s41 = sphi 0, %s40
      %s57 = sphi 0, %s41
      %s63 = sphi 0, %s65
      %s66 = sphi 0, %s63
      %s67 = sphi 0, %s66
      %s83 = sphi 0, %s67
    $region4: #{tpu_custom_call.1} parent=1 // loop_header_branch
      %30 = sbr.rel (%p28) target = $region8
    $region5: #{tpu_custom_call.1} parent=1 // loop_body
      %s32 = ssub.s32 %s27, 1
      %s33 = ssub.s32 %s27, 2
      %s34 = sadd.s32 %s27, 1
      %s35 = ssub.s32 %s27, %s34
      %p36 = scmp.eq.s32.totalorder %s35, 0
      %s38 = sadd.s32 %s37, 1
      %s39 = scalar_select %p36, %s37, %s38
      %p42 = pneg %p36
      %p43 = scmp.eq.s32.totalorder %s27, 1
      %p44 = por %p42, %p43
      %p45 = scmp.ne.s32.totalorder %s37, %s40
      %p46 = scmp.eq.s32.totalorder %s27, 0
      %p47 = por %p45, %p46
      %p48 = scmp.ne.s32.totalorder %s37, %s40
      %p49 = scmp.eq.s32.totalorder %s32, 1
      %p50 = por %p48, %p49
      %p51 = scmp.ne.s32.totalorder %s40, %s41
      %p52 = scmp.eq.s32.totalorder %s32, 0
      %p53 = por %p51, %p52
      %p54 = scmp.ne.s32.totalorder %s40, %s41
      %p55 = scmp.eq.s32.totalorder %s33, 1
      %p56 = por %p54, %p55
      %p58 = scmp.ne.s32.totalorder %s41, %s57
      %p59 = scmp.eq.s32.totalorder %s33, 0
      %p60 = por %p58, %p59
      %s61 = ssub.s32 %s27, %s34
      %p62 = scmp.eq.s32.totalorder %s61, 0
      %s64 = sadd.s32 %s63, 1
      %s65 = scalar_select %p62, %s63, %s64
      %p68 = pneg %p62
      %p69 = scmp.eq.s32.totalorder %s27, 1
      %p70 = por %p68, %p69
      %p71 = scmp.ne.s32.totalorder %s63, %s66
      %p72 = scmp.eq.s32.totalorder %s27, 0
      %p73 = por %p71, %p72
      %p74 = scmp.ne.s32.totalorder %s63, %s66
      %p75 = scmp.eq.s32.totalorder %s32, 1
      %p76 = por %p74, %p75
      %p77 = scmp.ne.s32.totalorder %s66, %s67
      %p78 = scmp.eq.s32.totalorder %s32, 0
      %p79 = por %p77, %p78
      %p80 = scmp.ne.s32.totalorder %s66, %s67
      %p81 = scmp.eq.s32.totalorder %s33, 1
      %p82 = por %p80, %p81
      %p84 = scmp.ne.s32.totalorder %s67, %s83
      %p85 = scmp.eq.s32.totalorder %s33, 0
      %p86 = por %p84, %p85
      %p87 = scmp.le.s32.totalorder 1, %s27
      %p88 = scmp.lt.s32.totalorder %s27, 3
      %p89 = pnand %p87, %p88
      %p90 = pneg %p89
      // Predicated region
      $region9: #{tpu_custom_call.1} parent=5 // pred_check
        _
      $region10: #{tpu_custom_call.1} parent=5 // pred_check_branch
        %92 = sbr.rel (%p89) target = $region12
      $region11: #{tpu_custom_call.1} parent=5 // pred_region
        %s93 = ssub.s32 %s27, 1
      $region12: #{tpu_custom_call.1} parent=5 // pred_fallthru
        _
      %p94 = scmp.lt.s32.totalorder %s27, 2
      // Predicated region
      $region13: #{tpu_custom_call.1} parent=5 // pred_check
        %p95 = pneg %p94
      $region14: #{tpu_custom_call.1} parent=5 // pred_check_branch
        %97 = sbr.rel (%p95) target = $region16
      $region15: #{tpu_custom_call.1} parent=5 // pred_region
        // Predicated region
        $region17: #{tpu_custom_call.1} parent=15 // pred_check
          %p98 = pneg %p47
        $region18: #{tpu_custom_call.1} parent=15 // pred_check_branch
          %100 = sbr.rel (%p98) target = $region20
        $region19: #{tpu_custom_call.1} parent=15 // pred_region
          %p101 = scmp.lt.s32.totalorder %s27, 1
          %s102 = scalar_select %p101, %s27, 1
          %s103 = smul.addr %s102, 8
          %s104 = scalar_lea.vmem %s2, %s103
        $region20: #{tpu_custom_call.1} parent=15 // pred_fallthru
          _
      $region16: #{tpu_custom_call.1} parent=5 // pred_fallthru
        _
      %p105 = scmp.le.s32.totalorder 1, %s27
      %p106 = scmp.lt.s32.totalorder %s27, 3
      %p107 = pnand %p105, %p106
      %p108 = pneg %p107
      // Predicated region
      $region21: #{tpu_custom_call.1} parent=5 // pred_check
        _
      $region22: #{tpu_custom_call.1} parent=5 // pred_check_branch
        %110 = sbr.rel (%p107) target = $region24
      $region23: #{tpu_custom_call.1} parent=5 // pred_region
        %s111 = ssub.s32 %s27, 1
        %p112 = scmp.lt.s32.totalorder %s32, 1
        %s113 = scalar_select %p112, %s32, 1
        %s114 = smul.addr %s113, 8
        %s115 = scalar_lea.vmem %s2, %s114
        %p116 = pneg %p53
        %p117 = pneg %p50
        %p118 = pneg %p79
        %p119 = pneg %p76
        %s120 = sand.u32 %s66, 1
        %s121 = scalar_lea.sflag [#allocation9], %s120
        %s122 = sand.u32 %s66, 1
        %s123 = smul.addr %s122, 8
        %s124 = scalar_lea.vmem [#allocation8], %s123
        %p125 = scmp.lt.s32.totalorder %s32, 1
        %s126 = scalar_select %p125, %s32, 1
        %s127 = smul.addr %s126, 8
        %s128 = scalar_lea.vmem %s2, %s127
        %s129 = smul.u32 %s32, 8
        loop: start=0, step=1, limit=8
        $region25: #{tpu_custom_call.1} parent=23 // loop_pre_header
          _
        $region26: #{tpu_custom_call.1} parent=23 // loop_header
          %s131 = sphi 0, %s135
          %p132 = scmp.ge.s32.totalorder %s131, 8
        $region27: #{tpu_custom_call.1} parent=23 // loop_header_branch
          %134 = sbr.rel (%p132) target = $region31
        $region28: #{tpu_custom_call.1} parent=23 // loop_body
          %s136 = sadd.s32 %s129, %s131
          %s137 = sld [smem:[#allocation6 + %s136]]
          %s138 = sld [smem:[#allocation7 + %s136]]
          %s139 = scalar_lea.hbm %s3, %s137
          %s140 = scalar_lea.vmem [#allocation2], %s131
          // Predicated region
          $region32: #{tpu_custom_call.1} parent=28 // pred_check
            _
          $region33: #{tpu_custom_call.1} parent=28 // pred_check_branch
            %142 = sbr.rel target = $region35
          $region34: #{tpu_custom_call.1} parent=28 // pred_region
            %143 = sst [smem:[#allocation12]] [#allocation11]
            %144 = sst [smem:[#allocation13]] [#allocation10]
          $region35: #{tpu_custom_call.1} parent=28 // pred_fallthru
            _
          %146 = shalt.err (0)
          %s148 = sshll.u32 %s139, 4
          %s149 = int_to_ptr.hbm [resolvable:$true] %s148
          %s150 = sshll.u32 %s140, 4
          %s151 = int_to_ptr.vmem [resolvable:$true] %s150
          %153 = dma.hbm_to_vmem [thread:$0]  %s149, 16, %s151, [#allocation4]
          %s154 = smul.u32 %s138, 64
          %s155 = sadd.s32 %s137, %s154
          %s156 = scalar_lea.hbm %s4, %s155
          %s157 = scalar_lea.vmem [#allocation3], %s131
          %s158 = scalar_lea.sflag [#allocation4], 1
          // Predicated region
          $region36: #{tpu_custom_call.1} parent=28 // pred_check
            _
          $region37: #{tpu_custom_call.1} parent=28 // pred_check_branch
            %160 = sbr.rel target = $region39
          $region38: #{tpu_custom_call.1} parent=28 // pred_region
            %161 = sst [smem:[#allocation12]] [#allocation15]
            %162 = sst [smem:[#allocation13]] [#allocation14]
          $region39: #{tpu_custom_call.1} parent=28 // pred_fallthru
            _
          %164 = shalt.err (0)
          %s166 = sshll.u32 %s156, 4
          %s167 = int_to_ptr.hbm [resolvable:$true] %s166
          %s168 = sshll.u32 %s157, 4
          %s169 = int_to_ptr.vmem [resolvable:$true] %s168
          %171 = dma.hbm_to_vmem [thread:$0]  %s167, 16, %s169, %s158
        $region29: #{tpu_custom_call.1} parent=23 // loop_footer
          %s135 = sadd.s32 1, %s131
        $region30: #{tpu_custom_call.1} parent=23 // loop_footer_branch
          %130 = sbr.rel target = $region26
        $region31: #{tpu_custom_call.1} parent=23 // loop_exit
          _
        loop: start=0, step=1, limit=8
        $region40: #{tpu_custom_call.1} parent=23 // loop_pre_header
          _
        $region41: #{tpu_custom_call.1} parent=23 // loop_header
          %s173 = sphi 0, %s177
          %p174 = scmp.ge.s32.totalorder %s173, 8
        $region42: #{tpu_custom_call.1} parent=23 // loop_header_branch
          %176 = sbr.rel (%p174) target = $region46
        $region43: #{tpu_custom_call.1} parent=23 // loop_body
          %179 = dma.done [#allocation4], 16
          %s180 = scalar_lea.sflag [#allocation4], 1
          %182 = dma.done %s180, 16
        $region44: #{tpu_custom_call.1} parent=23 // loop_footer
          %s177 = sadd.s32 1, %s173
        $region45: #{tpu_custom_call.1} parent=23 // loop_footer_branch
          %172 = sbr.rel target = $region41
        $region46: #{tpu_custom_call.1} parent=23 // loop_exit
          _
        %v183 = vld [vmem:[#allocation2] sm:$0xff]
        %v184 = vld [vmem:[#allocation3] sm:$0xff]
        %v185 = vld [vmem:[%s128] sm:$0xff]
        %vm186 = vcmp.gt.s32.totalorder %v185, 0
        %v187 = vsel %vm186, 1, 0
        %188 = vset.pattern.permute.xlu0 0
        %189 = vperm.xlu0 %188, %v187
        %v190 = vpop.permute.xlu0 %189
        %vm191 = vcmp.eq.s32.totalorder %v190, 1
        %v192 = vsel %vm191, %v184, 0.0
        %v193 = vadd.f32 %v183, %v192
        %194 = vset.pattern.permute.xlu0 1
        %195 = vperm.xlu0 %194, %v187
        %v196 = vpop.permute.xlu0 %195
        %vm197 = vcmp.eq.s32.totalorder %v196, 1
        %v198 = vsel %vm197, %v193, 0.0
        %199 = vst [vmem:[%s124] sm:$0xff] %v198
        %s200 = sand.u32 %s66, 1
        %s201 = scalar_lea.sflag [#allocation9], %s200
        %s202 = sand.u32 %s66, 1
        %s203 = smul.addr %s202, 8
        %s204 = scalar_lea.vmem [#allocation8], %s203
        // Predicated region
        $region47: #{tpu_custom_call.1} parent=23 // pred_check
          %p205 = pneg %p76
        $region48: #{tpu_custom_call.1} parent=23 // pred_check_branch
          %207 = sbr.rel (%p205) target = $region50
        $region49: #{tpu_custom_call.1} parent=23 // pred_region
          %209 = vsyncadd %s201, 0
          %s210 = smul.addr %s32, 8
          %s211 = scalar_lea.hbm %s5, %s210
          %s213 = sshll.u32 %s204, 4
          %s214 = int_to_ptr.vmem [resolvable:$true] %s213
          %s215 = sshll.u32 %s211, 4
          %s216 = int_to_ptr.hbm [resolvable:$true] %s215
          %218 = dma.vmem_to_hbm [thread:$0]  %s214, 128, %s216, %s201
        $region50: #{tpu_custom_call.1} parent=23 // pred_fallthru
          _
      $region24: #{tpu_custom_call.1} parent=5 // pred_fallthru
        _
      %p219 = scmp.le.s32.totalorder 2, %s27
      // Predicated region
      $region51: #{tpu_custom_call.1} parent=5 // pred_check
        %p220 = pneg %p219
      $region52: #{tpu_custom_call.1} parent=5 // pred_check_branch
        %222 = sbr.rel (%p220) target = $region54
      $region53: #{tpu_custom_call.1} parent=5 // pred_region
        %s223 = ssub.s32 %s27, 2
        // Predicated region
        $region55: #{tpu_custom_call.1} parent=53 // pred_check
          %p224 = pneg %p82
        $region56: #{tpu_custom_call.1} parent=53 // pred_check_branch
          %226 = sbr.rel (%p224) target = $region58
        $region57: #{tpu_custom_call.1} parent=53 // pred_region
          %s227 = sand.u32 %s67, 1
          %s228 = scalar_lea.sflag [#allocation9], %s227
          %s229 = sand.u32 %s67, 1
          %s230 = smul.addr %s229, 8
          %s231 = scalar_lea.vmem [#allocation8], %s230
          %233 = dma.done %s228, 128
        $region58: #{tpu_custom_call.1} parent=53 // pred_fallthru
          _
      $region54: #{tpu_custom_call.1} parent=5 // pred_fallthru
        _
    $region6: #{tpu_custom_call.1} parent=1 // loop_footer
      %s31 = sadd.s32 1, %s27
    $region7: #{tpu_custom_call.1} parent=1 // loop_footer_branch
      %26 = sbr.rel target = $region3
    $region8: #{tpu_custom_call.1} parent=1 // loop_exit
      _
    %234 = vsyncpa [#allocation9], 1
    %s235 = scalar_lea.sflag [#allocation9], 1
    %236 = vsyncpa %s235, 1
  %237 = vsyncmov [#allocation4]
  %s238 = vpop.sfrf %237
  %p239 = scmp.eq.s32.totalorder %s238, 0
  %p240 = pneg %p239
  %242 = shalt.err (%p240)
  %s243 = scalar_lea.sflag [#allocation4], 1
  %244 = vsyncmov %s243
  %s245 = vpop.sfrf %244
  %p246 = scmp.eq.s32.totalorder %s245, 0
  %p247 = pneg %p246
  %249 = shalt.err (%p247)

</llo_original>
